<compile_context>
chip_gen: v7x
topology: tpu7x:2x2x1
jax: 0.10.0
libtpu: 0.0.40
codegen_flags: <defaults>
</compile_context>

<pallas_src>
import functools

import jax
import jax.numpy as jnp
from jax import lax
from jax.experimental import pallas as pl
from jax.experimental.pallas import tpu as pltpu


def _elu_plus_one(x):
    # elu(x) + 1 == x + 1 for x > 0, exp(x) for x <= 0.
    # Clamp the exp argument so the discarded branch never overflows.
    return jnp.where(x > 0, x + 1.0, jnp.exp(jnp.minimum(x, 0.0)))


def _linear_attn_kernel(q_ref, k_ref, v_ref, o_ref, *, n_heads, eps):
    # Block is (1, T, D) for one batch element; D = n_heads * E maps to lanes.
    q = q_ref[0].astype(jnp.float32)   # (T, D)
    k = k_ref[0].astype(jnp.float32)   # (T, D)
    v = v_ref[0].astype(jnp.float32)   # (T, D)

    T, D = q.shape
    E = D // n_heads

    # Feature map applied lane-dense across all heads at once.
    Q = _elu_plus_one(q)               # (T, D)
    K = _elu_plus_one(k)               # (T, D)

    ones_col = jnp.ones((T, 1), jnp.float32)

    outs = []
    for h in range(n_heads):           # static, unrolled head loop
        lo = h * E
        hi = lo + E
        Qh = Q[:, lo:hi]               # (T, E) — static lane slice
        Kh = K[:, lo:hi]               # (T, E)
        Vh = v[:, lo:hi]               # (T, E)

        # Fold the denominator into the MXU: [V | 1] gives
        # context_ext = K^T @ [V | 1] = [K^T V | ksum]  -> (E, E+1)
        v_ext = jnp.concatenate([Vh, ones_col], axis=1)            # (T, E+1)

        # Contract dim 0 of both operands directly (no explicit K transpose).
        ctx_ext = lax.dot_general(
            Kh, v_ext,
            dimension_numbers=(((0,), (0,)), ((), ())),
            preferred_element_type=jnp.float32)                    # (E, E+1)

        # Numerator and denominator from a single matmul.
        nd = jnp.dot(Qh, ctx_ext, preferred_element_type=jnp.float32)  # (T, E+1)
        den = nd[:, E:E + 1] + eps                                  # (T, 1)
        outs.append(nd[:, :E] * pl.reciprocal(den, approx=False))   # (T, E)

    # Single lane-dense (T, D) store.
    o_ref[0] = jnp.concatenate(outs, axis=1).astype(o_ref.dtype)


def linear_attention_pallas(query, key, value, n_heads, eps=1e-6):
    """query/key/value: (B, T, d_model) float32 -> out: (B, T, d_model)."""
    B, T, D = query.shape
    assert D % n_heads == 0

    kernel = functools.partial(_linear_attn_kernel, n_heads=n_heads, eps=eps)

    # One batch element per grid step; heads handled inside the kernel, so no
    # HBM transposes are needed on either side of the pallas_call.
    spec = pl.BlockSpec((1, T, D), lambda b: (b, 0, 0))

    # 3 inputs + 1 output, double-buffered, plus headroom; stay well below
    # v7x's 64 MiB physical VMEM.
    block_bytes = T * D * 4
    vmem_bytes = int(min(48 * 1024 * 1024,
                         max(16 * 1024 * 1024, 16 * block_bytes)))

    out = pl.pallas_call(
        kernel,
        out_shape=jax.ShapeDtypeStruct((B, T, D), query.dtype),
        grid_spec=pltpu.PrefetchScalarGridSpec(
            num_scalar_prefetch=0,
            grid=(B,),
            in_specs=[spec, spec, spec],
            out_specs=spec,
        ),
        compiler_params=pltpu.CompilerParams(
            dimension_semantics=("parallel",),
            vmem_limit_bytes=vmem_bytes),
    )(query, key, value)
    return out


def linear_attention_reference(query, key, value, n_heads, eps=1e-6):
    """Pure-JAX reference mirroring the PyTorch module."""
    B, T, D = query.shape
    E = D // n_heads
    q = query.reshape(B, T, n_heads, E).transpose(0, 2, 1, 3)
    k = key.reshape(B, T, n_heads, E).transpose(0, 2, 1, 3)
    v = value.reshape(B, T, n_heads, E).transpose(0, 2, 1, 3)
    Q = jax.nn.elu(q) + 1.0
    K = jax.nn.elu(k) + 1.0
    k_sum = K.sum(axis=-2)                                        # (B,H,E)
    d_inv = 1.0 / (jnp.einsum('bhnd,bhd->bhn', Q, k_sum) + eps)   # (B,H,T)
    context = jnp.einsum('bhnd,bhne->bhde', K, v)                 # (B,H,E,E)
    out = jnp.einsum('bhde,bhnd,bhn->bhne', context, Q, d_inv)    # (B,H,T,E)
    return out.transpose(0, 2, 1, 3).reshape(B, T, D)


if __name__ == "__main__":
    B, T, d_model, n_heads = 2, 8, 32, 4

    key0 = jax.random.PRNGKey(0)
    kq, kk, kv = jax.random.split(key0, 3)
    query = jax.random.normal(kq, (B, T, d_model), dtype=jnp.float32)
    key_ = jax.random.normal(kk, (B, T, d_model), dtype=jnp.float32)
    value = jax.random.normal(kv, (B, T, d_model), dtype=jnp.float32)

    out = linear_attention_pallas(query, key_, value, n_heads)
    out = jax.block_until_ready(out)

    ref = linear_attention_reference(query, key_, value, n_heads)
    assert out.shape == (B, T, d_model)
    assert jnp.allclose(out, ref, atol=1e-5, rtol=1e-5), "mismatch vs reference"

    print("KERNEL_OK")
</pallas_src>

<mosaic_0001>
module attributes {stable_mosaic.version = 11 : i64} {
  func.func @_linear_attn_kernel(%arg0: i32, %arg1: memref<1x8x32xf32, #tpu.memory_space<vmem>>, %arg2: memref<1x8x32xf32, #tpu.memory_space<vmem>>, %arg3: memref<1x8x32xf32, #tpu.memory_space<vmem>>, %arg4: memref<1x8x32xf32, #tpu.memory_space<vmem>>) attributes {dimension_semantics = [#tpu.dimension_semantics<parallel>], iteration_bounds = array<i64: 2>, scalar_prefetch = 0 : i64, scratch_operands = 0 : i64, tpu.core_type = #tpu.core_type<tc>, window_params = [{transform_indices = @transform_0, window_bounds = array<i64: 1, 8, 32>}, {transform_indices = @transform_1, window_bounds = array<i64: 1, 8, 32>}, {transform_indices = @transform_2, window_bounds = array<i64: 1, 8, 32>}, {transform_indices = @transform_3, window_bounds = array<i64: 1, 8, 32>}]} {
    %c0 = arith.constant 0 : index
    %c0_0 = arith.constant 0 : index
    %c0_1 = arith.constant 0 : index
    %0 = vector.load %arg1[%c0, %c0_0, %c0_1] : memref<1x8x32xf32, #tpu.memory_space<vmem>>, vector<1x8x32xf32>
    %1 = vector.shape_cast %0 : vector<1x8x32xf32> to vector<8x32xf32>
    %c0_2 = arith.constant 0 : index
    %c0_3 = arith.constant 0 : index
    %c0_4 = arith.constant 0 : index
    %2 = vector.load %arg2[%c0_2, %c0_3, %c0_4] : memref<1x8x32xf32, #tpu.memory_space<vmem>>, vector<1x8x32xf32>
    %3 = vector.shape_cast %2 : vector<1x8x32xf32> to vector<8x32xf32>
    %c0_5 = arith.constant 0 : index
    %c0_6 = arith.constant 0 : index
    %c0_7 = arith.constant 0 : index
    %4 = vector.load %arg3[%c0_5, %c0_6, %c0_7] : memref<1x8x32xf32, #tpu.memory_space<vmem>>, vector<1x8x32xf32>
    %5 = vector.shape_cast %4 : vector<1x8x32xf32> to vector<8x32xf32>
    %cst = arith.constant 0.000000e+00 : f32
    %6 = vector.broadcast %cst : f32 to vector<8x32xf32>
    %7 = arith.cmpf ogt, %1, %6 : vector<8x32xf32>
    %cst_8 = arith.constant 1.000000e+00 : f32
    %8 = vector.broadcast %cst_8 : f32 to vector<8x32xf32>
    %9 = arith.addf %1, %8 : vector<8x32xf32>
    %cst_9 = arith.constant 0.000000e+00 : f32
    %10 = vector.broadcast %cst_9 : f32 to vector<8x32xf32>
    %11 = arith.minimumf %1, %10 : vector<8x32xf32>
    %12 = math.exp %11 : vector<8x32xf32>
    %13 = arith.select %7, %9, %12 : vector<8x32xi1>, vector<8x32xf32>
    %cst_10 = arith.constant 0.000000e+00 : f32
    %14 = vector.broadcast %cst_10 : f32 to vector<8x32xf32>
    %15 = arith.cmpf ogt, %3, %14 : vector<8x32xf32>
    %cst_11 = arith.constant 1.000000e+00 : f32
    %16 = vector.broadcast %cst_11 : f32 to vector<8x32xf32>
    %17 = arith.addf %3, %16 : vector<8x32xf32>
    %cst_12 = arith.constant 0.000000e+00 : f32
    %18 = vector.broadcast %cst_12 : f32 to vector<8x32xf32>
    %19 = arith.minimumf %3, %18 : vector<8x32xf32>
    %20 = math.exp %19 : vector<8x32xf32>
    %21 = arith.select %15, %17, %20 : vector<8x32xi1>, vector<8x32xf32>
    %cst_13 = arith.constant 1.000000e+00 : f32
    %22 = vector.broadcast %cst_13 : f32 to vector<8x1xf32>
    %23 = vector.extract_strided_slice %13 {offsets = [0, 0], sizes = [8, 8], strides = [1, 1]} : vector<8x32xf32> to vector<8x8xf32>
    %24 = vector.extract_strided_slice %21 {offsets = [0, 0], sizes = [8, 8], strides = [1, 1]} : vector<8x32xf32> to vector<8x8xf32>
    %25 = vector.extract_strided_slice %5 {offsets = [0, 0], sizes = [8, 8], strides = [1, 1]} : vector<8x32xf32> to vector<8x8xf32>
    %26 = tpu.concatenate %25, %22 in 1 : vector<8x8xf32>, vector<8x1xf32> -> vector<8x9xf32>
    %cst_14 = arith.constant dense<0.000000e+00> : vector<8x9xf32>
    %27 = tpu.matmul %24, %26, %cst_14 {dimension_numbers = #tpu.dot_dimension_numbers<[0], [0], [1], [1], [0, 1, 1, 1], [], []>} : vector<8x8xf32>, vector<8x9xf32>, vector<8x9xf32> -> vector<8x9xf32>
    %cst_15 = arith.constant dense<0.000000e+00> : vector<8x9xf32>
    %28 = tpu.matmul %23, %27, %cst_15 {dimension_numbers = #tpu.dot_dimension_numbers<[1], [0], [0], [1], [0, 0, 1, 1], [], []>} : vector<8x8xf32>, vector<8x9xf32>, vector<8x9xf32> -> vector<8x9xf32>
    %29 = vector.extract_strided_slice %28 {offsets = [0, 8], sizes = [8, 1], strides = [1, 1]} : vector<8x9xf32> to vector<8x1xf32>
    %cst_16 = arith.constant 9.99999997E-7 : f32
    %30 = vector.broadcast %cst_16 : f32 to vector<8x1xf32>
    %31 = arith.addf %29, %30 : vector<8x1xf32>
    %32 = vector.extract_strided_slice %28 {offsets = [0, 0], sizes = [8, 8], strides = [1, 1]} : vector<8x9xf32> to vector<8x8xf32>
    %33 = tpu.reciprocal %31 : vector<8x1xf32> -> vector<8x1xf32>
    %34 = vector.broadcast %33 : vector<8x1xf32> to vector<8x8xf32>
    %35 = arith.mulf %32, %34 : vector<8x8xf32>
    %36 = vector.extract_strided_slice %13 {offsets = [0, 8], sizes = [8, 8], strides = [1, 1]} : vector<8x32xf32> to vector<8x8xf32>
    %37 = vector.extract_strided_slice %21 {offsets = [0, 8], sizes = [8, 8], strides = [1, 1]} : vector<8x32xf32> to vector<8x8xf32>
    %38 = vector.extract_strided_slice %5 {offsets = [0, 8], sizes = [8, 8], strides = [1, 1]} : vector<8x32xf32> to vector<8x8xf32>
    %39 = tpu.concatenate %38, %22 in 1 : vector<8x8xf32>, vector<8x1xf32> -> vector<8x9xf32>
    %cst_17 = arith.constant dense<0.000000e+00> : vector<8x9xf32>
    %40 = tpu.matmul %37, %39, %cst_17 {dimension_numbers = #tpu.dot_dimension_numbers<[0], [0], [1], [1], [0, 1, 1, 1], [], []>} : vector<8x8xf32>, vector<8x9xf32>, vector<8x9xf32> -> vector<8x9xf32>
    %cst_18 = arith.constant dense<0.000000e+00> : vector<8x9xf32>
    %41 = tpu.matmul %36, %40, %cst_18 {dimension_numbers = #tpu.dot_dimension_numbers<[1], [0], [0], [1], [0, 0, 1, 1], [], []>} : vector<8x8xf32>, vector<8x9xf32>, vector<8x9xf32> -> vector<8x9xf32>
    %42 = vector.extract_strided_slice %41 {offsets = [0, 8], sizes = [8, 1], strides = [1, 1]} : vector<8x9xf32> to vector<8x1xf32>
    %cst_19 = arith.constant 9.99999997E-7 : f32
    %43 = vector.broadcast %cst_19 : f32 to vector<8x1xf32>
    %44 = arith.addf %42, %43 : vector<8x1xf32>
    %45 = vector.extract_strided_slice %41 {offsets = [0, 0], sizes = [8, 8], strides = [1, 1]} : vector<8x9xf32> to vector<8x8xf32>
    %46 = tpu.reciprocal %44 : vector<8x1xf32> -> vector<8x1xf32>
    %47 = vector.broadcast %46 : vector<8x1xf32> to vector<8x8xf32>
    %48 = arith.mulf %45, %47 : vector<8x8xf32>
    %49 = vector.extract_strided_slice %13 {offsets = [0, 16], sizes = [8, 8], strides = [1, 1]} : vector<8x32xf32> to vector<8x8xf32>
    %50 = vector.extract_strided_slice %21 {offsets = [0, 16], sizes = [8, 8], strides = [1, 1]} : vector<8x32xf32> to vector<8x8xf32>
    %51 = vector.extract_strided_slice %5 {offsets = [0, 16], sizes = [8, 8], strides = [1, 1]} : vector<8x32xf32> to vector<8x8xf32>
    %52 = tpu.concatenate %51, %22 in 1 : vector<8x8xf32>, vector<8x1xf32> -> vector<8x9xf32>
    %cst_20 = arith.constant dense<0.000000e+00> : vector<8x9xf32>
    %53 = tpu.matmul %50, %52, %cst_20 {dimension_numbers = #tpu.dot_dimension_numbers<[0], [0], [1], [1], [0, 1, 1, 1], [], []>} : vector<8x8xf32>, vector<8x9xf32>, vector<8x9xf32> -> vector<8x9xf32>
    %cst_21 = arith.constant dense<0.000000e+00> : vector<8x9xf32>
    %54 = tpu.matmul %49, %53, %cst_21 {dimension_numbers = #tpu.dot_dimension_numbers<[1], [0], [0], [1], [0, 0, 1, 1], [], []>} : vector<8x8xf32>, vector<8x9xf32>, vector<8x9xf32> -> vector<8x9xf32>
    %55 = vector.extract_strided_slice %54 {offsets = [0, 8], sizes = [8, 1], strides = [1, 1]} : vector<8x9xf32> to vector<8x1xf32>
    %cst_22 = arith.constant 9.99999997E-7 : f32
    %56 = vector.broadcast %cst_22 : f32 to vector<8x1xf32>
    %57 = arith.addf %55, %56 : vector<8x1xf32>
    %58 = vector.extract_strided_slice %54 {offsets = [0, 0], sizes = [8, 8], strides = [1, 1]} : vector<8x9xf32> to vector<8x8xf32>
    %59 = tpu.reciprocal %57 : vector<8x1xf32> -> vector<8x1xf32>
    %60 = vector.broadcast %59 : vector<8x1xf32> to vector<8x8xf32>
    %61 = arith.mulf %58, %60 : vector<8x8xf32>
    %62 = vector.extract_strided_slice %13 {offsets = [0, 24], sizes = [8, 8], strides = [1, 1]} : vector<8x32xf32> to vector<8x8xf32>
    %63 = vector.extract_strided_slice %21 {offsets = [0, 24], sizes = [8, 8], strides = [1, 1]} : vector<8x32xf32> to vector<8x8xf32>
    %64 = vector.extract_strided_slice %5 {offsets = [0, 24], sizes = [8, 8], strides = [1, 1]} : vector<8x32xf32> to vector<8x8xf32>
    %65 = tpu.concatenate %64, %22 in 1 : vector<8x8xf32>, vector<8x1xf32> -> vector<8x9xf32>
    %cst_23 = arith.constant dense<0.000000e+00> : vector<8x9xf32>
    %66 = tpu.matmul %63, %65, %cst_23 {dimension_numbers = #tpu.dot_dimension_numbers<[0], [0], [1], [1], [0, 1, 1, 1], [], []>} : vector<8x8xf32>, vector<8x9xf32>, vector<8x9xf32> -> vector<8x9xf32>
    %cst_24 = arith.constant dense<0.000000e+00> : vector<8x9xf32>
    %67 = tpu.matmul %62, %66, %cst_24 {dimension_numbers = #tpu.dot_dimension_numbers<[1], [0], [0], [1], [0, 0, 1, 1], [], []>} : vector<8x8xf32>, vector<8x9xf32>, vector<8x9xf32> -> vector<8x9xf32>
    %68 = vector.extract_strided_slice %67 {offsets = [0, 8], sizes = [8, 1], strides = [1, 1]} : vector<8x9xf32> to vector<8x1xf32>
    %cst_25 = arith.constant 9.99999997E-7 : f32
    %69 = vector.broadcast %cst_25 : f32 to vector<8x1xf32>
    %70 = arith.addf %68, %69 : vector<8x1xf32>
    %71 = vector.extract_strided_slice %67 {offsets = [0, 0], sizes = [8, 8], strides = [1, 1]} : vector<8x9xf32> to vector<8x8xf32>
    %72 = tpu.reciprocal %70 : vector<8x1xf32> -> vector<8x1xf32>
    %73 = vector.broadcast %72 : vector<8x1xf32> to vector<8x8xf32>
    %74 = arith.mulf %71, %73 : vector<8x8xf32>
    %75 = tpu.concatenate %35, %48, %61, %74 in 1 : vector<8x8xf32>, vector<8x8xf32>, vector<8x8xf32>, vector<8x8xf32> -> vector<8x32xf32>
    %c0_26 = arith.constant 0 : index
    %c0_27 = arith.constant 0 : index
    %c0_28 = arith.constant 0 : index
    %76 = vector.load %arg4[%c0_26, %c0_27, %c0_28] : memref<1x8x32xf32, #tpu.memory_space<vmem>>, vector<1x8x32xf32>
    %77 = vector.shape_cast %76 : vector<1x8x32xf32> to vector<8x32xf32>
    %78 = vector.shape_cast %75 : vector<8x32xf32> to vector<1x8x32xf32>
    tpu.vector_store %arg4[%c0_26, %c0_27, %c0_28], %78 {strides = array<i32>} : memref<1x8x32xf32, #tpu.memory_space<vmem>>, vector<1x8x32xf32>,
    return
  }
  func.func @transform_0(%arg0: i32) -> (i32, i32, i32) {
    %c0_i32 = arith.constant 0 : i32
    %c0_i32_0 = arith.constant 0 : i32
    %c0_i32_1 = arith.constant 0 : i32
    return %arg0, %c0_i32, %c0_i32_0 : i32, i32, i32
  }
  func.func @transform_1(%arg0: i32) -> (i32, i32, i32) {
    %c0_i32 = arith.constant 0 : i32
    %c0_i32_0 = arith.constant 0 : i32
    %c0_i32_1 = arith.constant 0 : i32
    return %arg0, %c0_i32, %c0_i32_0 : i32, i32, i32
  }
  func.func @transform_2(%arg0: i32) -> (i32, i32, i32) {
    %c0_i32 = arith.constant 0 : i32
    %c0_i32_0 = arith.constant 0 : i32
    %c0_i32_1 = arith.constant 0 : i32
    return %arg0, %c0_i32, %c0_i32_0 : i32, i32, i32
  }
  func.func @transform_3(%arg0: i32) -> (i32, i32, i32) {
    %c0_i32 = arith.constant 0 : i32
    %c0_i32_0 = arith.constant 0 : i32
    %c0_i32_1 = arith.constant 0 : i32
    return %arg0, %c0_i32, %c0_i32_0 : i32, i32, i32
  }
}

</mosaic_0001>

<llo_original>
// kernel: tpu_custom_call.1
$region0: #{tpu_custom_call.1}
  #allocation0 [shape = 'u32[]', space=smem, size = 0x4, offset = 0x4, fixed_abs, tag = 'smem constant byte address 0x4 - core index']
  #allocation1 [shape = 'u32[144,128]{1,0:T(1,128)}', space=vmem, size = 0x12000, scoped, tag = 'internal scratch']
  %s0 = inlined_call_operand.hbm [shape: f32[2,8,32], index: 0, kind: input, shape index: {}]
  %s1 = inlined_call_operand.hbm [shape: f32[2,8,32], index: 1, kind: input, shape index: {}]
  %s2 = inlined_call_operand.hbm [shape: f32[2,8,32], index: 2, kind: input, shape index: {}]
  %s3 = inlined_call_operand.hbm [shape: f32[2,8,32], index: 3, kind: output, shape index: {}]
  %s4 = sld [smem:[#allocation0]]
  $region57: #{tpu_custom_call.1} parent=0
    _
  %s6 = ssub.s32 1, %s4
  %s7 = scalar_select 0, %s6, %s4
  $region1: #{tpu_custom_call.1} parent=0
    #allocation2 [shape = 'u8[8192]{0}', space=vmem, size = 0x2000, scoped, tag = 'input window, operand 0']
    #allocation3 [shape = 's32[2]{0}', space=sflag, size = 0x8, scoped, tag = 'scoped memory for tpu_custom_call.1']
    #allocation4 [shape = 's32[2]{0}', space=sflag, size = 0x8, scoped, tag = 'scoped memory for tpu_custom_call.1']
    #allocation5 [shape = 'u8[8192]{0}', space=vmem, size = 0x2000, scoped, tag = 'input window, operand 1']
    #allocation6 [shape = 's32[2]{0}', space=sflag, size = 0x8, scoped, tag = 'scoped memory for tpu_custom_call.1']
    #allocation7 [shape = 'u8[8192]{0}', space=vmem, size = 0x2000, scoped, tag = 'input window, operand 2']
    #allocation8 [shape = 'u8[8192]{0}', space=vmem, size = 0x2000, scoped, tag = 'output window, operand 0']
    %8 = vsyncpa [#allocation3], 0
    %s9 = scalar_lea.sflag [#allocation3], 1
    %10 = vsyncpa %s9, 0
    %11 = vsyncpa [#allocation6], 0
    %s12 = scalar_lea.sflag [#allocation6], 1
    %13 = vsyncpa %s12, 0
    %14 = vsyncpa [#allocation4], 0
    %s15 = scalar_lea.sflag [#allocation4], 1
    %16 = vsyncpa %s15, 0
    loop: start=0, step=1, limit=4
    $region2: #{tpu_custom_call.1} parent=1 // loop_pre_header
      _
    $region3: #{tpu_custom_call.1} parent=1 // loop_header
      %s18 = sphi 0, %s22
      %p19 = scmp.ge.s32.totalorder %s18, 4
      %s28 = sphi 0, %s30
      %s31 = sphi 0, %s28
      %s32 = sphi 0, %s31
      %s48 = sphi 0, %s32
      %s54 = sphi 0, %s56
      %s57 = sphi 0, %s54
      %s58 = sphi 0, %s57
      %s74 = sphi 0, %s58
      %s80 = sphi 0, %s82
      %s83 = sphi 0, %s80
      %s84 = sphi 0, %s83
      %s100 = sphi 0, %s84
      %s106 = sphi 0, %s108
      %s109 = sphi 0, %s106
      %s110 = sphi 0, %s109
      %s126 = sphi 0, %s110
    $region4: #{tpu_custom_call.1} parent=1 // loop_header_branch
      %21 = sbr.rel (%p19) target = $region8
    $region5: #{tpu_custom_call.1} parent=1 // loop_body
      %s23 = ssub.s32 %s18, 1
      %s24 = ssub.s32 %s18, 2
      %s25 = sadd.s32 %s18, 1
      %s26 = ssub.s32 %s18, %s25
      %p27 = scmp.eq.s32.totalorder %s26, 0
      %s29 = sadd.s32 %s28, 1
      %s30 = scalar_select %p27, %s28, %s29
      %p33 = pneg %p27
      %p34 = scmp.eq.s32.totalorder %s18, 1
      %p35 = por %p33, %p34
      %p36 = scmp.ne.s32.totalorder %s28, %s31
      %p37 = scmp.eq.s32.totalorder %s18, 0
      %p38 = por %p36, %p37
      %p39 = scmp.ne.s32.totalorder %s28, %s31
      %p40 = scmp.eq.s32.totalorder %s23, 1
      %p41 = por %p39, %p40
      %p42 = scmp.ne.s32.totalorder %s31, %s32
      %p43 = scmp.eq.s32.totalorder %s23, 0
      %p44 = por %p42, %p43
      %p45 = scmp.ne.s32.totalorder %s31, %s32
      %p46 = scmp.eq.s32.totalorder %s24, 1
      %p47 = por %p45, %p46
      %p49 = scmp.ne.s32.totalorder %s32, %s48
      %p50 = scmp.eq.s32.totalorder %s24, 0
      %p51 = por %p49, %p50
      %s52 = ssub.s32 %s18, %s25
      %p53 = scmp.eq.s32.totalorder %s52, 0
      %s55 = sadd.s32 %s54, 1
      %s56 = scalar_select %p53, %s54, %s55
      %p59 = pneg %p53
      %p60 = scmp.eq.s32.totalorder %s18, 1
      %p61 = por %p59, %p60
      %p62 = scmp.ne.s32.totalorder %s54, %s57
      %p63 = scmp.eq.s32.totalorder %s18, 0
      %p64 = por %p62, %p63
      %p65 = scmp.ne.s32.totalorder %s54, %s57
      %p66 = scmp.eq.s32.totalorder %s23, 1
      %p67 = por %p65, %p66
      %p68 = scmp.ne.s32.totalorder %s57, %s58
      %p69 = scmp.eq.s32.totalorder %s23, 0
      %p70 = por %p68, %p69
      %p71 = scmp.ne.s32.totalorder %s57, %s58
      %p72 = scmp.eq.s32.totalorder %s24, 1
      %p73 = por %p71, %p72
      %p75 = scmp.ne.s32.totalorder %s58, %s74
      %p76 = scmp.eq.s32.totalorder %s24, 0
      %p77 = por %p75, %p76
      %s78 = ssub.s32 %s18, %s25
      %p79 = scmp.eq.s32.totalorder %s78, 0
      %s81 = sadd.s32 %s80, 1
      %s82 = scalar_select %p79, %s80, %s81
      %p85 = pneg %p79
      %p86 = scmp.eq.s32.totalorder %s18, 1
      %p87 = por %p85, %p86
      %p88 = scmp.ne.s32.totalorder %s80, %s83
      %p89 = scmp.eq.s32.totalorder %s18, 0
      %p90 = por %p88, %p89
      %p91 = scmp.ne.s32.totalorder %s80, %s83
      %p92 = scmp.eq.s32.totalorder %s23, 1
      %p93 = por %p91, %p92
      %p94 = scmp.ne.s32.totalorder %s83, %s84
      %p95 = scmp.eq.s32.totalorder %s23, 0
      %p96 = por %p94, %p95
      %p97 = scmp.ne.s32.totalorder %s83, %s84
      %p98 = scmp.eq.s32.totalorder %s24, 1
      %p99 = por %p97, %p98
      %p101 = scmp.ne.s32.totalorder %s84, %s100
      %p102 = scmp.eq.s32.totalorder %s24, 0
      %p103 = por %p101, %p102
      %s104 = ssub.s32 %s18, %s25
      %p105 = scmp.eq.s32.totalorder %s104, 0
      %s107 = sadd.s32 %s106, 1
      %s108 = scalar_select %p105, %s106, %s107
      %p111 = pneg %p105
      %p112 = scmp.eq.s32.totalorder %s18, 1
      %p113 = por %p111, %p112
      %p114 = scmp.ne.s32.totalorder %s106, %s109
      %p115 = scmp.eq.s32.totalorder %s18, 0
      %p116 = por %p114, %p115
      %p117 = scmp.ne.s32.totalorder %s106, %s109
      %p118 = scmp.eq.s32.totalorder %s23, 1
      %p119 = por %p117, %p118
      %p120 = scmp.ne.s32.totalorder %s109, %s110
      %p121 = scmp.eq.s32.totalorder %s23, 0
      %p122 = por %p120, %p121
      %p123 = scmp.ne.s32.totalorder %s109, %s110
      %p124 = scmp.eq.s32.totalorder %s24, 1
      %p125 = por %p123, %p124
      %p127 = scmp.ne.s32.totalorder %s110, %s126
      %p128 = scmp.eq.s32.totalorder %s24, 0
      %p129 = por %p127, %p128
      %p130 = scmp.le.s32.totalorder 1, %s18
      %p131 = scmp.lt.s32.totalorder %s18, 3
      %p132 = pnand %p130, %p131
      %p133 = pneg %p132
      // Predicated region
      $region9: #{tpu_custom_call.1} parent=5 // pred_check
        _
      $region10: #{tpu_custom_call.1} parent=5 // pred_check_branch
        %135 = sbr.rel (%p132) target = $region12
      $region11: #{tpu_custom_call.1} parent=5 // pred_region
        %s136 = ssub.s32 %s18, 1
      $region12: #{tpu_custom_call.1} parent=5 // pred_fallthru
        _
      %p137 = scmp.lt.s32.totalorder %s18, 2
      // Predicated region
      $region13: #{tpu_custom_call.1} parent=5 // pred_check
        %p138 = pneg %p137
      $region14: #{tpu_custom_call.1} parent=5 // pred_check_branch
        %140 = sbr.rel (%p138) target = $region16
      $region15: #{tpu_custom_call.1} parent=5 // pred_region
        // Predicated region
        $region17: #{tpu_custom_call.1} parent=15 // pred_check
          %p141 = pneg %p38
        $region18: #{tpu_custom_call.1} parent=15 // pred_check_branch
          %143 = sbr.rel (%p141) target = $region20
        $region19: #{tpu_custom_call.1} parent=15 // pred_region
          %s144 = sand.u32 %s28, 1
          %s145 = scalar_lea.sflag [#allocation3], %s144
          %s146 = sand.u32 %s28, 1
          %s147 = smul.addr %s146, 8
          %s148 = scalar_lea.vmem [#allocation2], %s147
          %s150 = ssub.s32 128, 128
          %151 = vsyncadd %s145, %s150
          %s152 = smul.addr %s18, 128
          %s153 = scalar_lea.hbm %s0, %s152
          %s155 = sshll.u32 %s148, 4
          %s156 = int_to_ptr.vmem [resolvable:$true] %s155
          %158 = dma.hbm_to_vmem [thread:$0]  %s153, 128, %s156, %s145
        $region20: #{tpu_custom_call.1} parent=15 // pred_fallthru
          _
        // Predicated region
        $region21: #{tpu_custom_call.1} parent=15 // pred_check
          %p159 = pneg %p64
        $region22: #{tpu_custom_call.1} parent=15 // pred_check_branch
          %161 = sbr.rel (%p159) target = $region24
        $region23: #{tpu_custom_call.1} parent=15 // pred_region
          %s162 = sand.u32 %s18, 1
          %s163 = scalar_lea.sflag [#allocation6], %s162
          %s164 = sand.u32 %s54, 1
          %s165 = smul.addr %s164, 8
          %s166 = scalar_lea.vmem [#allocation5], %s165
          %s168 = ssub.s32 128, 128
          %169 = vsyncadd %s163, %s168
          %s170 = smul.addr %s18, 128
          %s171 = scalar_lea.hbm %s1, %s170
          %s173 = sshll.u32 %s166, 4
          %s174 = int_to_ptr.vmem [resolvable:$true] %s173
          %176 = dma.hbm_to_vmem [thread:$0]  %s171, 128, %s174, %s163
        $region24: #{tpu_custom_call.1} parent=15 // pred_fallthru
          _
        // Predicated region
        $region25: #{tpu_custom_call.1} parent=15 // pred_check
          %p177 = pneg %p90
        $region26: #{tpu_custom_call.1} parent=15 // pred_check_branch
          %179 = sbr.rel (%p177) target = $region28
        $region27: #{tpu_custom_call.1} parent=15 // pred_region
          %s180 = sand.u32 %s18, 1
          %s181 = scalar_lea.sflag [#allocation6], %s180
          %s182 = sand.u32 %s80, 1
          %s183 = smul.addr %s182, 8
          %s184 = scalar_lea.vmem [#allocation7], %s183
          %s186 = ssub.s32 128, 128
          %187 = vsyncadd %s181, %s186
          %s188 = smul.addr %s18, 128
          %s189 = scalar_lea.hbm %s2, %s188
          %s191 = sshll.u32 %s184, 4
          %s192 = int_to_ptr.vmem [resolvable:$true] %s191
          %194 = dma.hbm_to_vmem [thread:$0]  %s189, 128, %s192, %s181
        $region28: #{tpu_custom_call.1} parent=15 // pred_fallthru
          _
      $region16: #{tpu_custom_call.1} parent=5 // pred_fallthru
        _
      %p195 = scmp.le.s32.totalorder 1, %s18
      %p196 = scmp.lt.s32.totalorder %s18, 3
      %p197 = pnand %p195, %p196
      %p198 = pneg %p197
      // Predicated region
      $region29: #{tpu_custom_call.1} parent=5 // pred_check
        _
      $region30: #{tpu_custom_call.1} parent=5 // pred_check_branch
        %200 = sbr.rel (%p197) target = $region32
      $region31: #{tpu_custom_call.1} parent=5 // pred_region
        %s201 = ssub.s32 %s18, 1
        %s202 = sand.u32 %s31, 1
        %s203 = scalar_lea.sflag [#allocation3], %s202
        %s204 = sand.u32 %s31, 1
        %s205 = smul.addr %s204, 8
        %s206 = scalar_lea.vmem [#allocation2], %s205
        // Predicated region
        $region33: #{tpu_custom_call.1} parent=31 // pred_check
          %p207 = pneg %p44
        $region34: #{tpu_custom_call.1} parent=31 // pred_check_branch
          %209 = sbr.rel (%p207) target = $region36
        $region35: #{tpu_custom_call.1} parent=31 // pred_region
          %210 = dma.done %s203, 128
        $region36: #{tpu_custom_call.1} parent=31 // pred_fallthru
          _
        %s211 = sand.u32 %s23, 1
        %s212 = scalar_lea.sflag [#allocation6], %s211
        %s213 = sand.u32 %s57, 1
        %s214 = smul.addr %s213, 8
        %s215 = scalar_lea.vmem [#allocation5], %s214
        // Predicated region
        $region37: #{tpu_custom_call.1} parent=31 // pred_check
          %p216 = pneg %p70
        $region38: #{tpu_custom_call.1} parent=31 // pred_check_branch
          %218 = sbr.rel (%p216) target = $region40
        $region39: #{tpu_custom_call.1} parent=31 // pred_region
          %219 = dma.done %s212, 128
        $region40: #{tpu_custom_call.1} parent=31 // pred_fallthru
          _
        %s220 = sand.u32 %s23, 1
        %s221 = scalar_lea.sflag [#allocation6], %s220
        %s222 = sand.u32 %s83, 1
        %s223 = smul.addr %s222, 8
        %s224 = scalar_lea.vmem [#allocation7], %s223
        // Predicated region
        $region41: #{tpu_custom_call.1} parent=31 // pred_check
          %p225 = pneg %p96
        $region42: #{tpu_custom_call.1} parent=31 // pred_check_branch
          %227 = sbr.rel (%p225) target = $region44
        $region43: #{tpu_custom_call.1} parent=31 // pred_region
          %228 = dma.done %s221, 128
        $region44: #{tpu_custom_call.1} parent=31 // pred_fallthru
          _
        %s229 = sand.u32 %s31, 1
        %s230 = scalar_lea.sflag [#allocation3], %s229
        %s231 = sand.u32 %s31, 1
        %s232 = smul.addr %s231, 8
        %s233 = scalar_lea.vmem [#allocation2], %s232
        %p234 = pneg %p44
        %p235 = pneg %p41
        %s236 = sand.u32 %s23, 1
        %s237 = scalar_lea.sflag [#allocation6], %s236
        %s238 = sand.u32 %s57, 1
        %s239 = smul.addr %s238, 8
        %s240 = scalar_lea.vmem [#allocation5], %s239
        %p241 = pneg %p70
        %p242 = pneg %p67
        %s243 = sand.u32 %s23, 1
        %s244 = scalar_lea.sflag [#allocation6], %s243
        %s245 = sand.u32 %s83, 1
        %s246 = smul.addr %s245, 8
        %s247 = scalar_lea.vmem [#allocation7], %s246
        %p248 = pneg %p96
        %p249 = pneg %p93
        %p250 = pneg %p122
        %p251 = pneg %p119
        %s252 = sand.u32 %s109, 1
        %s253 = scalar_lea.sflag [#allocation4], %s252
        %s254 = sand.u32 %s109, 1
        %s255 = smul.addr %s254, 8
        %s256 = scalar_lea.vmem [#allocation8], %s255
        %v257 = vld [vmem:[%s206] sm:$0xff]
        %v258 = vld [vmem:[%s215] sm:$0xff]
        %v259 = vld [vmem:[%s224] sm:$0xff]
        %vm260 = vcmp.gt.f32.partialorder %v257, 0.0
        %v261 = vadd.f32 %v257, 1.0
        %v262 = vmin.f32 %v257, 0.0
        %v263 = vmul.f32 %v262, 1.442695
        %v264 = vpow.pop %v263
        %v265 = vsel %vm260, %v261, %v264
        %vm266 = vcmp.gt.f32.partialorder %v258, 0.0
        %v267 = vadd.f32 %v258, 1.0
        %v268 = vmin.f32 %v258, 0.0
        %v269 = vmul.f32 %v268, 1.442695
        %v270 = vpow.pop %v269
        %v271 = vsel %vm266, %v267, %v270
        %vm272 = vcmask 64512
        %v273 = vsel %vm272, %v259, 1.0
        %274 = vxpose.xlu0.b32.start [1/16] %v271, 128
        %275 = vxpose.xlu0.b32.cont [2/16] 0.0, 128
        %276 = vxpose.xlu0.b32.cont [3/16] 0.0, 128
        %277 = vxpose.xlu0.b32.cont [4/16] 0.0, 128
        %278 = vxpose.xlu0.b32.cont [5/16] 0.0, 128
        %279 = vxpose.xlu0.b32.cont [6/16] 0.0, 128
        %280 = vxpose.xlu0.b32.cont [7/16] 0.0, 128
        %281 = vxpose.xlu0.b32.cont [8/16] 0.0, 128
        %282 = vxpose.xlu0.b32.cont [9/16] 0.0, 128
        %283 = vxpose.xlu0.b32.cont [10/16] 0.0, 128
        %284 = vxpose.xlu0.b32.cont [11/16] 0.0, 128
        %285 = vxpose.xlu0.b32.cont [12/16] 0.0, 128
        %286 = vxpose.xlu0.b32.cont [13/16] 0.0, 128
        %287 = vxpose.xlu0.b32.cont [14/16] 0.0, 128
        %288 = vxpose.xlu0.b32.cont [15/16] 0.0, 128
        %289 = vxpose.xlu0.b32.end [16/16] 0.0, 128
        %v290 = vpop.trf.xlu0
        %v291 = vpop.trf.xlu0
        %v292 = vpop.trf.xlu0
        %v293 = vpop.trf.xlu0
        %v294 = vpop.trf.xlu0
        %v295 = vpop.trf.xlu0
        %v296 = vpop.trf.xlu0
        %v297 = vpop.trf.xlu0
        %v298 = vpop.trf.xlu0
        %v299 = vpop.trf.xlu0
        %v300 = vpop.trf.xlu0
        %v301 = vpop.trf.xlu0
        %v302 = vpop.trf.xlu0
        %v303 = vpop.trf.xlu0
        %v304 = vpop.trf.xlu0
        %v305 = vpop.trf.xlu0
        %v307 = vsel %vm272, %v290, 0
        %309 = vmatprep.subr.mxu0 0.0
        %310 = vmatpush1.msra.mxu0 %v273
        %311 = vmatprep.subr.mxu0 0.0
        %312 = vmatpush1.msra.mxu0 0.0
        %313 = vmatprep.subr.mxu0 0.0
        %314 = vmatpush1.msra.mxu0 0.0
        %315 = vmatprep.subr.mxu0 0.0
        %316 = vmatpush1.msra.mxu0 0.0
        %317 = vmatprep.subr.mxu0 0.0
        %318 = vmatpush1.msra.mxu0 0.0
        %319 = vmatprep.subr.mxu0 0.0
        %320 = vmatpush1.msra.mxu0 0.0
        %321 = vmatprep.subr.mxu0 0.0
        %322 = vmatpush1.msra.mxu0 0.0
        %323 = vmatprep.subr.mxu0 0.0
        %324 = vmatpush1.msra.mxu0 0.0
        %325 = vmatprep.subr.mxu0 0.0
        %326 = vmatpush1.msra.mxu0 0.0
        %327 = vmatprep.subr.mxu0 0.0
        %328 = vmatpush1.msra.mxu0 0.0
        %329 = vmatprep.subr.mxu0 0.0
        %330 = vmatpush1.msra.mxu0 0.0
        %331 = vmatprep.subr.mxu0 0.0
        %332 = vmatpush1.msra.mxu0 0.0
        %333 = vmatprep.subr.mxu0 0.0
        %334 = vmatpush1.msra.mxu0 0.0
        %335 = vmatprep.subr.mxu0 0.0
        %336 = vmatpush1.msra.mxu0 0.0
        %337 = vmatprep.subr.mxu0 0.0
        %338 = vmatpush1.msra.mxu0 0.0
        %339 = vmatprep.subr.mxu0 0.0
        %340 = vmatpush1.msra.mxu0 0.0
        %341 = vmatprep.subr.mxu0 0.0
        %342 = vmatpush1.msra.mxu0 0.0
        %343 = vmatprep.subr.mxu0 0.0
        %344 = vmatpush1.msra.mxu0 0.0
        %345 = vmatprep.subr.mxu0 0.0
        %346 = vmatpush1.msra.mxu0 0.0
        %347 = vmatprep.subr.mxu0 0.0
        %348 = vmatpush1.msra.mxu0 0.0
        %349 = vmatprep.subr.mxu0 0.0
        %350 = vmatpush1.msra.mxu0 0.0
        %351 = vmatprep.subr.mxu0 0.0
        %352 = vmatpush1.msra.mxu0 0.0
        %353 = vmatprep.subr.mxu0 0.0
        %354 = vmatpush1.msra.mxu0 0.0
        %355 = vmatprep.subr.mxu0 0.0
        %356 = vmatpush1.msra.mxu0 0.0
        %357 = vmatprep.subr.mxu0 0.0
        %358 = vmatpush1.msra.mxu0 0.0
        %359 = vmatprep.subr.mxu0 0.0
        %360 = vmatpush1.msra.mxu0 0.0
        %361 = vmatprep.subr.mxu0 0.0
        %362 = vmatpush1.msra.mxu0 0.0
        %363 = vmatprep.subr.mxu0 0.0
        %364 = vmatpush1.msra.mxu0 0.0
        %365 = vmatprep.subr.mxu0 0.0
        %366 = vmatpush1.msra.mxu0 0.0
        %367 = vmatprep.subr.mxu0 0.0
        %368 = vmatpush1.msra.mxu0 0.0
        %369 = vmatprep.subr.mxu0 0.0
        %370 = vmatpush1.msra.mxu0 0.0
        %371 = vmatprep.subr.mxu0 0.0
        %372 = vmatpush1.msra.mxu0 0.0
        %373 = vmatprep.mubr.f32.mxu0 0.0
        %374 = vmatmul.mubr.f32.gmra.mrb[0].mxu0 %v307
        %v375 = vpop.f32.mrb[0].mxu0
        %v376 = vadd.f32 0.0, %v375
        %v377 = vpop.f32.mrb[0].mxu0
        %378 = vdwg.mxu0
        %v380 = vsel %vm272, %v265, 0
        %382 = vmatprep.subr.mxu0 0.0
        %383 = vmatpush1.msra.mxu0 %v376
        %384 = vmatprep.subr.mxu0 0.0
        %385 = vmatpush1.msra.mxu0 0.0
        %386 = vmatprep.subr.mxu0 0.0
        %387 = vmatpush1.msra.mxu0 0.0
        %388 = vmatprep.subr.mxu0 0.0
        %389 = vmatpush1.msra.mxu0 0.0
        %390 = vmatprep.subr.mxu0 0.0
        %391 = vmatpush1.msra.mxu0 0.0
        %392 = vmatprep.subr.mxu0 0.0
        %393 = vmatpush1.msra.mxu0 0.0
        %394 = vmatprep.subr.mxu0 0.0
        %395 = vmatpush1.msra.mxu0 0.0
        %396 = vmatprep.subr.mxu0 0.0
        %397 = vmatpush1.msra.mxu0 0.0
        %398 = vmatprep.subr.mxu0 0.0
        %399 = vmatpush1.msra.mxu0 0.0
        %400 = vmatprep.subr.mxu0 0.0
        %401 = vmatpush1.msra.mxu0 0.0
        %402 = vmatprep.subr.mxu0 0.0
        %403 = vmatpush1.msra.mxu0 0.0
        %404 = vmatprep.subr.mxu0 0.0
        %405 = vmatpush1.msra.mxu0 0.0
        %406 = vmatprep.subr.mxu0 0.0
        %407 = vmatpush1.msra.mxu0 0.0
        %408 = vmatprep.subr.mxu0 0.0
        %409 = vmatpush1.msra.mxu0 0.0
        %410 = vmatprep.subr.mxu0 0.0
        %411 = vmatpush1.msra.mxu0 0.0
        %412 = vmatprep.subr.mxu0 0.0
        %413 = vmatpush1.msra.mxu0 0.0
        %414 = vmatprep.subr.mxu0 0.0
        %415 = vmatpush1.msra.mxu0 0.0
        %416 = vmatprep.subr.mxu0 0.0
        %417 = vmatpush1.msra.mxu0 0.0
        %418 = vmatprep.subr.mxu0 0.0
        %419 = vmatpush1.msra.mxu0 0.0
        %420 = vmatprep.subr.mxu0 0.0
        %421 = vmatpush1.msra.mxu0 0.0
        %422 = vmatprep.subr.mxu0 0.0
        %423 = vmatpush1.msra.mxu0 0.0
        %424 = vmatprep.subr.mxu0 0.0
        %425 = vmatpush1.msra.mxu0 0.0
        %426 = vmatprep.subr.mxu0 0.0
        %427 = vmatpush1.msra.mxu0 0.0
        %428 = vmatprep.subr.mxu0 0.0
        %429 = vmatpush1.msra.mxu0 0.0
        %430 = vmatprep.subr.mxu0 0.0
        %431 = vmatpush1.msra.mxu0 0.0
        %432 = vmatprep.subr.mxu0 0.0
        %433 = vmatpush1.msra.mxu0 0.0
        %434 = vmatprep.subr.mxu0 0.0
        %435 = vmatpush1.msra.mxu0 0.0
        %436 = vmatprep.subr.mxu0 0.0
        %437 = vmatpush1.msra.mxu0 0.0
        %438 = vmatprep.subr.mxu0 0.0
        %439 = vmatpush1.msra.mxu0 0.0
        %440 = vmatprep.subr.mxu0 0.0
        %441 = vmatpush1.msra.mxu0 0.0
        %442 = vmatprep.subr.mxu0 0.0
        %443 = vmatpush1.msra.mxu0 0.0
        %444 = vmatprep.subr.mxu0 0.0
        %445 = vmatpush1.msra.mxu0 0.0
        %446 = vmatprep.mubr.f32.mxu0 0.0
        %447 = vmatmul.mubr.f32.gmra.mrb[0].mxu0 %v380
        %v448 = vpop.f32.mrb[0].mxu0
        %v449 = vadd.f32 0.0, %v448
        %v450 = vpop.f32.mrb[0].mxu0
        %451 = vdwg.mxu0
        %v452 = vadd.f32 %v449, 1e-06
        %v453 = vrcp.pop %v452
        %455 = vset.pattern.permute.xlu0 8
        %456 = vperm.xlu0 %455, %v453
        %v457 = vpop.permute.xlu0 %456
        %v459 = vmul.f32 %v449, %v457
        %461 = vrot.lane.b32.xlu0 %v259, 120
        %v462 = vpop.permute.xlu0 %461
        %v464 = vsel %vm272, %v462, 1.0
        %466 = vrot.lane.b32.xlu0 %v271, 120
        %v467 = vpop.permute.xlu0 %466
        %469 = vxpose.xlu0.b32.start [1/16] %v467, 128
        %470 = vxpose.xlu0.b32.cont [2/16] 0.0, 128
        %471 = vxpose.xlu0.b32.cont [3/16] 0.0, 128
        %472 = vxpose.xlu0.b32.cont [4/16] 0.0, 128
        %473 = vxpose.xlu0.b32.cont [5/16] 0.0, 128
        %474 = vxpose.xlu0.b32.cont [6/16] 0.0, 128
        %475 = vxpose.xlu0.b32.cont [7/16] 0.0, 128
        %476 = vxpose.xlu0.b32.cont [8/16] 0.0, 128
        %477 = vxpose.xlu0.b32.cont [9/16] 0.0, 128
        %478 = vxpose.xlu0.b32.cont [10/16] 0.0, 128
        %479 = vxpose.xlu0.b32.cont [11/16] 0.0, 128
        %480 = vxpose.xlu0.b32.cont [12/16] 0.0, 128
        %481 = vxpose.xlu0.b32.cont [13/16] 0.0, 128
        %482 = vxpose.xlu0.b32.cont [14/16] 0.0, 128
        %483 = vxpose.xlu0.b32.cont [15/16] 0.0, 128
        %484 = vxpose.xlu0.b32.end [16/16] 0.0, 128
        %v485 = vpop.trf.xlu0
        %v486 = vpop.trf.xlu0
        %v487 = vpop.trf.xlu0
        %v488 = vpop.trf.xlu0
        %v489 = vpop.trf.xlu0
        %v490 = vpop.trf.xlu0
        %v491 = vpop.trf.xlu0
        %v492 = vpop.trf.xlu0
        %v493 = vpop.trf.xlu0
        %v494 = vpop.trf.xlu0
        %v495 = vpop.trf.xlu0
        %v496 = vpop.trf.xlu0
        %v497 = vpop.trf.xlu0
        %v498 = vpop.trf.xlu0
        %v499 = vpop.trf.xlu0
        %v500 = vpop.trf.xlu0
        %v502 = vsel %vm272, %v485, 0
        %504 = vmatprep.subr.mxu0 0.0
        %505 = vmatpush1.msra.mxu0 %v464
        %506 = vmatprep.subr.mxu0 0.0
        %507 = vmatpush1.msra.mxu0 0.0
        %508 = vmatprep.subr.mxu0 0.0
        %509 = vmatpush1.msra.mxu0 0.0
        %510 = vmatprep.subr.mxu0 0.0
        %511 = vmatpush1.msra.mxu0 0.0
        %512 = vmatprep.subr.mxu0 0.0
        %513 = vmatpush1.msra.mxu0 0.0
        %514 = vmatprep.subr.mxu0 0.0
        %515 = vmatpush1.msra.mxu0 0.0
        %516 = vmatprep.subr.mxu0 0.0
        %517 = vmatpush1.msra.mxu0 0.0
        %518 = vmatprep.subr.mxu0 0.0
        %519 = vmatpush1.msra.mxu0 0.0
        %520 = vmatprep.subr.mxu0 0.0
        %521 = vmatpush1.msra.mxu0 0.0
        %522 = vmatprep.subr.mxu0 0.0
        %523 = vmatpush1.msra.mxu0 0.0
        %524 = vmatprep.subr.mxu0 0.0
        %525 = vmatpush1.msra.mxu0 0.0
        %526 = vmatprep.subr.mxu0 0.0
        %527 = vmatpush1.msra.mxu0 0.0
        %528 = vmatprep.subr.mxu0 0.0
        %529 = vmatpush1.msra.mxu0 0.0
        %530 = vmatprep.subr.mxu0 0.0
        %531 = vmatpush1.msra.mxu0 0.0
        %532 = vmatprep.subr.mxu0 0.0
        %533 = vmatpush1.msra.mxu0 0.0
        %534 = vmatprep.subr.mxu0 0.0
        %535 = vmatpush1.msra.mxu0 0.0
        %536 = vmatprep.subr.mxu0 0.0
        %537 = vmatpush1.msra.mxu0 0.0
        %538 = vmatprep.subr.mxu0 0.0
        %539 = vmatpush1.msra.mxu0 0.0
        %540 = vmatprep.subr.mxu0 0.0
        %541 = vmatpush1.msra.mxu0 0.0
        %542 = vmatprep.subr.mxu0 0.0
        %543 = vmatpush1.msra.mxu0 0.0
        %544 = vmatprep.subr.mxu0 0.0
        %545 = vmatpush1.msra.mxu0 0.0
        %546 = vmatprep.subr.mxu0 0.0
        %547 = vmatpush1.msra.mxu0 0.0
        %548 = vmatprep.subr.mxu0 0.0
        %549 = vmatpush1.msra.mxu0 0.0
        %550 = vmatprep.subr.mxu0 0.0
        %551 = vmatpush1.msra.mxu0 0.0
        %552 = vmatprep.subr.mxu0 0.0
        %553 = vmatpush1.msra.mxu0 0.0
        %554 = vmatprep.subr.mxu0 0.0
        %555 = vmatpush1.msra.mxu0 0.0
        %556 = vmatprep.subr.mxu0 0.0
        %557 = vmatpush1.msra.mxu0 0.0
        %558 = vmatprep.subr.mxu0 0.0
        %559 = vmatpush1.msra.mxu0 0.0
        %560 = vmatprep.subr.mxu0 0.0
        %561 = vmatpush1.msra.mxu0 0.0
        %562 = vmatprep.subr.mxu0 0.0
        %563 = vmatpush1.msra.mxu0 0.0
        %564 = vmatprep.subr.mxu0 0.0
        %565 = vmatpush1.msra.mxu0 0.0
        %566 = vmatprep.subr.mxu0 0.0
        %567 = vmatpush1.msra.mxu0 0.0
        %568 = vmatprep.mubr.f32.mxu0 0.0
        %569 = vmatmul.mubr.f32.gmra.mrb[0].mxu0 %v502
        %v570 = vpop.f32.mrb[0].mxu0
        %v571 = vadd.f32 0.0, %v570
        %v572 = vpop.f32.mrb[0].mxu0
        %573 = vdwg.mxu0
        %574 = vrot.lane.b32.xlu0 %v265, 120
        %v575 = vpop.permute.xlu0 %574
        %v576 = vsel %vm272, %v575, 0
        %578 = vmatprep.subr.mxu0 0.0
        %579 = vmatpush1.msra.mxu0 %v571
        %580 = vmatprep.subr.mxu0 0.0
        %581 = vmatpush1.msra.mxu0 0.0
        %582 = vmatprep.subr.mxu0 0.0
        %583 = vmatpush1.msra.mxu0 0.0
        %584 = vmatprep.subr.mxu0 0.0
        %585 = vmatpush1.msra.mxu0 0.0
        %586 = vmatprep.subr.mxu0 0.0
        %587 = vmatpush1.msra.mxu0 0.0
        %588 = vmatprep.subr.mxu0 0.0
        %589 = vmatpush1.msra.mxu0 0.0
        %590 = vmatprep.subr.mxu0 0.0
        %591 = vmatpush1.msra.mxu0 0.0
        %592 = vmatprep.subr.mxu0 0.0
        %593 = vmatpush1.msra.mxu0 0.0
        %594 = vmatprep.subr.mxu0 0.0
        %595 = vmatpush1.msra.mxu0 0.0
        %596 = vmatprep.subr.mxu0 0.0
        %597 = vmatpush1.msra.mxu0 0.0
        %598 = vmatprep.subr.mxu0 0.0
        %599 = vmatpush1.msra.mxu0 0.0
        %600 = vmatprep.subr.mxu0 0.0
        %601 = vmatpush1.msra.mxu0 0.0
        %602 = vmatprep.subr.mxu0 0.0
        %603 = vmatpush1.msra.mxu0 0.0
        %604 = vmatprep.subr.mxu0 0.0
        %605 = vmatpush1.msra.mxu0 0.0
        %606 = vmatprep.subr.mxu0 0.0
        %607 = vmatpush1.msra.mxu0 0.0
        %608 = vmatprep.subr.mxu0 0.0
        %609 = vmatpush1.msra.mxu0 0.0
        %610 = vmatprep.subr.mxu0 0.0
        %611 = vmatpush1.msra.mxu0 0.0
        %612 = vmatprep.subr.mxu0 0.0
        %613 = vmatpush1.msra.mxu0 0.0
        %614 = vmatprep.subr.mxu0 0.0
        %615 = vmatpush1.msra.mxu0 0.0
        %616 = vmatprep.subr.mxu0 0.0
        %617 = vmatpush1.msra.mxu0 0.0
        %618 = vmatprep.subr.mxu0 0.0
        %619 = vmatpush1.msra.mxu0 0.0
        %620 = vmatprep.subr.mxu0 0.0
        %621 = vmatpush1.msra.mxu0 0.0
        %622 = vmatprep.subr.mxu0 0.0
        %623 = vmatpush1.msra.mxu0 0.0
        %624 = vmatprep.subr.mxu0 0.0
        %625 = vmatpush1.msra.mxu0 0.0
        %626 = vmatprep.subr.mxu0 0.0
        %627 = vmatpush1.msra.mxu0 0.0
        %628 = vmatprep.subr.mxu0 0.0
        %629 = vmatpush1.msra.mxu0 0.0
        %630 = vmatprep.subr.mxu0 0.0
        %631 = vmatpush1.msra.mxu0 0.0
        %632 = vmatprep.subr.mxu0 0.0
        %633 = vmatpush1.msra.mxu0 0.0
        %634 = vmatprep.subr.mxu0 0.0
        %635 = vmatpush1.msra.mxu0 0.0
        %636 = vmatprep.subr.mxu0 0.0
        %637 = vmatpush1.msra.mxu0 0.0
        %638 = vmatprep.subr.mxu0 0.0
        %639 = vmatpush1.msra.mxu0 0.0
        %640 = vmatprep.subr.mxu0 0.0
        %641 = vmatpush1.msra.mxu0 0.0
        %642 = vmatprep.mubr.f32.mxu0 0.0
        %643 = vmatmul.mubr.f32.gmra.mrb[0].mxu0 %v576
        %v644 = vpop.f32.mrb[0].mxu0
        %v645 = vadd.f32 0.0, %v644
        %v646 = vpop.f32.mrb[0].mxu0
        %647 = vdwg.mxu0
        %v648 = vadd.f32 %v645, 1e-06
        %v649 = vrcp.pop %v648
        %651 = vset.pattern.permute.xlu0 8
        %652 = vperm.xlu0 %651, %v649
        %v653 = vpop.permute.xlu0 %652
        %v655 = vmul.f32 %v645, %v653
        %656 = vrot.lane.b32.xlu0 %v259, 112
        %v657 = vpop.permute.xlu0 %656
        %v659 = vsel %vm272, %v657, 1.0
        %660 = vrot.lane.b32.xlu0 %v271, 112
        %v661 = vpop.permute.xlu0 %660
        %663 = vxpose.xlu0.b32.start [1/16] %v661, 128
        %664 = vxpose.xlu0.b32.cont [2/16] 0.0, 128
        %665 = vxpose.xlu0.b32.cont [3/16] 0.0, 128
        %666 = vxpose.xlu0.b32.cont [4/16] 0.0, 128
        %667 = vxpose.xlu0.b32.cont [5/16] 0.0, 128
        %668 = vxpose.xlu0.b32.cont [6/16] 0.0, 128
        %669 = vxpose.xlu0.b32.cont [7/16] 0.0, 128
        %670 = vxpose.xlu0.b32.cont [8/16] 0.0, 128
        %671 = vxpose.xlu0.b32.cont [9/16] 0.0, 128
        %672 = vxpose.xlu0.b32.cont [10/16] 0.0, 128
        %673 = vxpose.xlu0.b32.cont [11/16] 0.0, 128
        %674 = vxpose.xlu0.b32.cont [12/16] 0.0, 128
        %675 = vxpose.xlu0.b32.cont [13/16] 0.0, 128
        %676 = vxpose.xlu0.b32.cont [14/16] 0.0, 128
        %677 = vxpose.xlu0.b32.cont [15/16] 0.0, 128
        %678 = vxpose.xlu0.b32.end [16/16] 0.0, 128
        %v679 = vpop.trf.xlu0
        %v680 = vpop.trf.xlu0
        %v681 = vpop.trf.xlu0
        %v682 = vpop.trf.xlu0
        %v683 = vpop.trf.xlu0
        %v684 = vpop.trf.xlu0
        %v685 = vpop.trf.xlu0
        %v686 = vpop.trf.xlu0
        %v687 = vpop.trf.xlu0
        %v688 = vpop.trf.xlu0
        %v689 = vpop.trf.xlu0
        %v690 = vpop.trf.xlu0
        %v691 = vpop.trf.xlu0
        %v692 = vpop.trf.xlu0
        %v693 = vpop.trf.xlu0
        %v694 = vpop.trf.xlu0
        %v696 = vsel %vm272, %v679, 0
        %698 = vmatprep.subr.mxu0 0.0
        %699 = vmatpush1.msra.mxu0 %v659
        %700 = vmatprep.subr.mxu0 0.0
        %701 = vmatpush1.msra.mxu0 0.0
        %702 = vmatprep.subr.mxu0 0.0
        %703 = vmatpush1.msra.mxu0 0.0
        %704 = vmatprep.subr.mxu0 0.0
        %705 = vmatpush1.msra.mxu0 0.0
        %706 = vmatprep.subr.mxu0 0.0
        %707 = vmatpush1.msra.mxu0 0.0
        %708 = vmatprep.subr.mxu0 0.0
        %709 = vmatpush1.msra.mxu0 0.0
        %710 = vmatprep.subr.mxu0 0.0
        %711 = vmatpush1.msra.mxu0 0.0
        %712 = vmatprep.subr.mxu0 0.0
        %713 = vmatpush1.msra.mxu0 0.0
        %714 = vmatprep.subr.mxu0 0.0
        %715 = vmatpush1.msra.mxu0 0.0
        %716 = vmatprep.subr.mxu0 0.0
        %717 = vmatpush1.msra.mxu0 0.0
        %718 = vmatprep.subr.mxu0 0.0
        %719 = vmatpush1.msra.mxu0 0.0
        %720 = vmatprep.subr.mxu0 0.0
        %721 = vmatpush1.msra.mxu0 0.0
        %722 = vmatprep.subr.mxu0 0.0
        %723 = vmatpush1.msra.mxu0 0.0
        %724 = vmatprep.subr.mxu0 0.0
        %725 = vmatpush1.msra.mxu0 0.0
        %726 = vmatprep.subr.mxu0 0.0
        %727 = vmatpush1.msra.mxu0 0.0
        %728 = vmatprep.subr.mxu0 0.0
        %729 = vmatpush1.msra.mxu0 0.0
        %730 = vmatprep.subr.mxu0 0.0
        %731 = vmatpush1.msra.mxu0 0.0
        %732 = vmatprep.subr.mxu0 0.0
        %733 = vmatpush1.msra.mxu0 0.0
        %734 = vmatprep.subr.mxu0 0.0
        %735 = vmatpush1.msra.mxu0 0.0
        %736 = vmatprep.subr.mxu0 0.0
        %737 = vmatpush1.msra.mxu0 0.0
        %738 = vmatprep.subr.mxu0 0.0
        %739 = vmatpush1.msra.mxu0 0.0
        %740 = vmatprep.subr.mxu0 0.0
        %741 = vmatpush1.msra.mxu0 0.0
        %742 = vmatprep.subr.mxu0 0.0
        %743 = vmatpush1.msra.mxu0 0.0
        %744 = vmatprep.subr.mxu0 0.0
        %745 = vmatpush1.msra.mxu0 0.0
        %746 = vmatprep.subr.mxu0 0.0
        %747 = vmatpush1.msra.mxu0 0.0
        %748 = vmatprep.subr.mxu0 0.0
        %749 = vmatpush1.msra.mxu0 0.0
        %750 = vmatprep.subr.mxu0 0.0
        %751 = vmatpush1.msra.mxu0 0.0
        %752 = vmatprep.subr.mxu0 0.0
        %753 = vmatpush1.msra.mxu0 0.0
        %754 = vmatprep.subr.mxu0 0.0
        %755 = vmatpush1.msra.mxu0 0.0
        %756 = vmatprep.subr.mxu0 0.0
        %757 = vmatpush1.msra.mxu0 0.0
        %758 = vmatprep.subr.mxu0 0.0
        %759 = vmatpush1.msra.mxu0 0.0
        %760 = vmatprep.subr.mxu0 0.0
        %761 = vmatpush1.msra.mxu0 0.0
        %762 = vmatprep.mubr.f32.mxu0 0.0
        %763 = vmatmul.mubr.f32.gmra.mrb[0].mxu0 %v696
        %v764 = vpop.f32.mrb[0].mxu0
        %v765 = vadd.f32 0.0, %v764
        %v766 = vpop.f32.mrb[0].mxu0
        %767 = vdwg.mxu0
        %768 = vrot.lane.b32.xlu0 %v265, 112
        %v769 = vpop.permute.xlu0 %768
        %v770 = vsel %vm272, %v769, 0
        %772 = vmatprep.subr.mxu0 0.0
        %773 = vmatpush1.msra.mxu0 %v765
        %774 = vmatprep.subr.mxu0 0.0
        %775 = vmatpush1.msra.mxu0 0.0
        %776 = vmatprep.subr.mxu0 0.0
        %777 = vmatpush1.msra.mxu0 0.0
        %778 = vmatprep.subr.mxu0 0.0
        %779 = vmatpush1.msra.mxu0 0.0
        %780 = vmatprep.subr.mxu0 0.0
        %781 = vmatpush1.msra.mxu0 0.0
        %782 = vmatprep.subr.mxu0 0.0
        %783 = vmatpush1.msra.mxu0 0.0
        %784 = vmatprep.subr.mxu0 0.0
        %785 = vmatpush1.msra.mxu0 0.0
        %786 = vmatprep.subr.mxu0 0.0
        %787 = vmatpush1.msra.mxu0 0.0
        %788 = vmatprep.subr.mxu0 0.0
        %789 = vmatpush1.msra.mxu0 0.0
        %790 = vmatprep.subr.mxu0 0.0
        %791 = vmatpush1.msra.mxu0 0.0
        %792 = vmatprep.subr.mxu0 0.0
        %793 = vmatpush1.msra.mxu0 0.0
        %794 = vmatprep.subr.mxu0 0.0
        %795 = vmatpush1.msra.mxu0 0.0
        %796 = vmatprep.subr.mxu0 0.0
        %797 = vmatpush1.msra.mxu0 0.0
        %798 = vmatprep.subr.mxu0 0.0
        %799 = vmatpush1.msra.mxu0 0.0
        %800 = vmatprep.subr.mxu0 0.0
        %801 = vmatpush1.msra.mxu0 0.0
        %802 = vmatprep.subr.mxu0 0.0
        %803 = vmatpush1.msra.mxu0 0.0
        %804 = vmatprep.subr.mxu0 0.0
        %805 = vmatpush1.msra.mxu0 0.0
        %806 = vmatprep.subr.mxu0 0.0
        %807 = vmatpush1.msra.mxu0 0.0
        %808 = vmatprep.subr.mxu0 0.0
        %809 = vmatpush1.msra.mxu0 0.0
        %810 = vmatprep.subr.mxu0 0.0
        %811 = vmatpush1.msra.mxu0 0.0
        %812 = vmatprep.subr.mxu0 0.0
        %813 = vmatpush1.msra.mxu0 0.0
        %814 = vmatprep.subr.mxu0 0.0
        %815 = vmatpush1.msra.mxu0 0.0
        %816 = vmatprep.subr.mxu0 0.0
        %817 = vmatpush1.msra.mxu0 0.0
        %818 = vmatprep.subr.mxu0 0.0
        %819 = vmatpush1.msra.mxu0 0.0
        %820 = vmatprep.subr.mxu0 0.0
        %821 = vmatpush1.msra.mxu0 0.0
        %822 = vmatprep.subr.mxu0 0.0
        %823 = vmatpush1.msra.mxu0 0.0
        %824 = vmatprep.subr.mxu0 0.0
        %825 = vmatpush1.msra.mxu0 0.0
        %826 = vmatprep.subr.mxu0 0.0
        %827 = vmatpush1.msra.mxu0 0.0
        %828 = vmatprep.subr.mxu0 0.0
        %829 = vmatpush1.msra.mxu0 0.0
        %830 = vmatprep.subr.mxu0 0.0
        %831 = vmatpush1.msra.mxu0 0.0
        %832 = vmatprep.subr.mxu0 0.0
        %833 = vmatpush1.msra.mxu0 0.0
        %834 = vmatprep.subr.mxu0 0.0
        %835 = vmatpush1.msra.mxu0 0.0
        %836 = vmatprep.mubr.f32.mxu0 0.0
        %837 = vmatmul.mubr.f32.gmra.mrb[0].mxu0 %v770
        %v838 = vpop.f32.mrb[0].mxu0
        %v839 = vadd.f32 0.0, %v838
        %v840 = vpop.f32.mrb[0].mxu0
        %841 = vdwg.mxu0
        %v842 = vadd.f32 %v839, 1e-06
        %v843 = vrcp.pop %v842
        %845 = vset.pattern.permute.xlu0 8
        %846 = vperm.xlu0 %845, %v843
        %v847 = vpop.permute.xlu0 %846
        %v849 = vmul.f32 %v839, %v847
        %850 = vrot.lane.b32.xlu0 %v259, 104
        %v851 = vpop.permute.xlu0 %850
        %v853 = vsel %vm272, %v851, 1.0
        %854 = vrot.lane.b32.xlu0 %v271, 104
        %v855 = vpop.permute.xlu0 %854
        %857 = vxpose.xlu0.b32.start [1/16] %v855, 128
        %858 = vxpose.xlu0.b32.cont [2/16] 0.0, 128
        %859 = vxpose.xlu0.b32.cont [3/16] 0.0, 128
        %860 = vxpose.xlu0.b32.cont [4/16] 0.0, 128
        %861 = vxpose.xlu0.b32.cont [5/16] 0.0, 128
        %862 = vxpose.xlu0.b32.cont [6/16] 0.0, 128
        %863 = vxpose.xlu0.b32.cont [7/16] 0.0, 128
        %864 = vxpose.xlu0.b32.cont [8/16] 0.0, 128
        %865 = vxpose.xlu0.b32.cont [9/16] 0.0, 128
        %866 = vxpose.xlu0.b32.cont [10/16] 0.0, 128
        %867 = vxpose.xlu0.b32.cont [11/16] 0.0, 128
        %868 = vxpose.xlu0.b32.cont [12/16] 0.0, 128
        %869 = vxpose.xlu0.b32.cont [13/16] 0.0, 128
        %870 = vxpose.xlu0.b32.cont [14/16] 0.0, 128
        %871 = vxpose.xlu0.b32.cont [15/16] 0.0, 128
        %872 = vxpose.xlu0.b32.end [16/16] 0.0, 128
        %v873 = vpop.trf.xlu0
        %v874 = vpop.trf.xlu0
        %v875 = vpop.trf.xlu0
        %v876 = vpop.trf.xlu0
        %v877 = vpop.trf.xlu0
        %v878 = vpop.trf.xlu0
        %v879 = vpop.trf.xlu0
        %v880 = vpop.trf.xlu0
        %v881 = vpop.trf.xlu0
        %v882 = vpop.trf.xlu0
        %v883 = vpop.trf.xlu0
        %v884 = vpop.trf.xlu0
        %v885 = vpop.trf.xlu0
        %v886 = vpop.trf.xlu0
        %v887 = vpop.trf.xlu0
        %v888 = vpop.trf.xlu0
        %v890 = vsel %vm272, %v873, 0
        %892 = vmatprep.subr.mxu0 0.0
        %893 = vmatpush1.msra.mxu0 %v853
        %894 = vmatprep.subr.mxu0 0.0
        %895 = vmatpush1.msra.mxu0 0.0
        %896 = vmatprep.subr.mxu0 0.0
        %897 = vmatpush1.msra.mxu0 0.0
        %898 = vmatprep.subr.mxu0 0.0
        %899 = vmatpush1.msra.mxu0 0.0
        %900 = vmatprep.subr.mxu0 0.0
        %901 = vmatpush1.msra.mxu0 0.0
        %902 = vmatprep.subr.mxu0 0.0
        %903 = vmatpush1.msra.mxu0 0.0
        %904 = vmatprep.subr.mxu0 0.0
        %905 = vmatpush1.msra.mxu0 0.0
        %906 = vmatprep.subr.mxu0 0.0
        %907 = vmatpush1.msra.mxu0 0.0
        %908 = vmatprep.subr.mxu0 0.0
        %909 = vmatpush1.msra.mxu0 0.0
        %910 = vmatprep.subr.mxu0 0.0
        %911 = vmatpush1.msra.mxu0 0.0
        %912 = vmatprep.subr.mxu0 0.0
        %913 = vmatpush1.msra.mxu0 0.0
        %914 = vmatprep.subr.mxu0 0.0
        %915 = vmatpush1.msra.mxu0 0.0
        %916 = vmatprep.subr.mxu0 0.0
        %917 = vmatpush1.msra.mxu0 0.0
        %918 = vmatprep.subr.mxu0 0.0
        %919 = vmatpush1.msra.mxu0 0.0
        %920 = vmatprep.subr.mxu0 0.0
        %921 = vmatpush1.msra.mxu0 0.0
        %922 = vmatprep.subr.mxu0 0.0
        %923 = vmatpush1.msra.mxu0 0.0
        %924 = vmatprep.subr.mxu0 0.0
        %925 = vmatpush1.msra.mxu0 0.0
        %926 = vmatprep.subr.mxu0 0.0
        %927 = vmatpush1.msra.mxu0 0.0
        %928 = vmatprep.subr.mxu0 0.0
        %929 = vmatpush1.msra.mxu0 0.0
        %930 = vmatprep.subr.mxu0 0.0
        %931 = vmatpush1.msra.mxu0 0.0
        %932 = vmatprep.subr.mxu0 0.0
        %933 = vmatpush1.msra.mxu0 0.0
        %934 = vmatprep.subr.mxu0 0.0
        %935 = vmatpush1.msra.mxu0 0.0
        %936 = vmatprep.subr.mxu0 0.0
        %937 = vmatpush1.msra.mxu0 0.0
        %938 = vmatprep.subr.mxu0 0.0
        %939 = vmatpush1.msra.mxu0 0.0
        %940 = vmatprep.subr.mxu0 0.0
        %941 = vmatpush1.msra.mxu0 0.0
        %942 = vmatprep.subr.mxu0 0.0
        %943 = vmatpush1.msra.mxu0 0.0
        %944 = vmatprep.subr.mxu0 0.0
        %945 = vmatpush1.msra.mxu0 0.0
        %946 = vmatprep.subr.mxu0 0.0
        %947 = vmatpush1.msra.mxu0 0.0
        %948 = vmatprep.subr.mxu0 0.0
        %949 = vmatpush1.msra.mxu0 0.0
        %950 = vmatprep.subr.mxu0 0.0
        %951 = vmatpush1.msra.mxu0 0.0
        %952 = vmatprep.subr.mxu0 0.0
        %953 = vmatpush1.msra.mxu0 0.0
        %954 = vmatprep.subr.mxu0 0.0
        %955 = vmatpush1.msra.mxu0 0.0
        %956 = vmatprep.mubr.f32.mxu0 0.0
        %957 = vmatmul.mubr.f32.gmra.mrb[0].mxu0 %v890
        %v958 = vpop.f32.mrb[0].mxu0
        %v959 = vadd.f32 0.0, %v958
        %v960 = vpop.f32.mrb[0].mxu0
        %961 = vdwg.mxu0
        %962 = vrot.lane.b32.xlu0 %v265, 104
        %v963 = vpop.permute.xlu0 %962
        %v964 = vsel %vm272, %v963, 0
        %966 = vmatprep.subr.mxu0 0.0
        %967 = vmatpush1.msra.mxu0 %v959
        %968 = vmatprep.subr.mxu0 0.0
        %969 = vmatpush1.msra.mxu0 0.0
        %970 = vmatprep.subr.mxu0 0.0
        %971 = vmatpush1.msra.mxu0 0.0
        %972 = vmatprep.subr.mxu0 0.0
        %973 = vmatpush1.msra.mxu0 0.0
        %974 = vmatprep.subr.mxu0 0.0
        %975 = vmatpush1.msra.mxu0 0.0
        %976 = vmatprep.subr.mxu0 0.0
        %977 = vmatpush1.msra.mxu0 0.0
        %978 = vmatprep.subr.mxu0 0.0
        %979 = vmatpush1.msra.mxu0 0.0
        %980 = vmatprep.subr.mxu0 0.0
        %981 = vmatpush1.msra.mxu0 0.0
        %982 = vmatprep.subr.mxu0 0.0
        %983 = vmatpush1.msra.mxu0 0.0
        %984 = vmatprep.subr.mxu0 0.0
        %985 = vmatpush1.msra.mxu0 0.0
        %986 = vmatprep.subr.mxu0 0.0
        %987 = vmatpush1.msra.mxu0 0.0
        %988 = vmatprep.subr.mxu0 0.0
        %989 = vmatpush1.msra.mxu0 0.0
        %990 = vmatprep.subr.mxu0 0.0
        %991 = vmatpush1.msra.mxu0 0.0
        %992 = vmatprep.subr.mxu0 0.0
        %993 = vmatpush1.msra.mxu0 0.0
        %994 = vmatprep.subr.mxu0 0.0
        %995 = vmatpush1.msra.mxu0 0.0
        %996 = vmatprep.subr.mxu0 0.0
        %997 = vmatpush1.msra.mxu0 0.0
        %998 = vmatprep.subr.mxu0 0.0
        %999 = vmatpush1.msra.mxu0 0.0
        %1000 = vmatprep.subr.mxu0 0.0
        %1001 = vmatpush1.msra.mxu0 0.0
        %1002 = vmatprep.subr.mxu0 0.0
        %1003 = vmatpush1.msra.mxu0 0.0
        %1004 = vmatprep.subr.mxu0 0.0
        %1005 = vmatpush1.msra.mxu0 0.0
        %1006 = vmatprep.subr.mxu0 0.0
        %1007 = vmatpush1.msra.mxu0 0.0
        %1008 = vmatprep.subr.mxu0 0.0
        %1009 = vmatpush1.msra.mxu0 0.0
        %1010 = vmatprep.subr.mxu0 0.0
        %1011 = vmatpush1.msra.mxu0 0.0
        %1012 = vmatprep.subr.mxu0 0.0
        %1013 = vmatpush1.msra.mxu0 0.0
        %1014 = vmatprep.subr.mxu0 0.0
        %1015 = vmatpush1.msra.mxu0 0.0
        %1016 = vmatprep.subr.mxu0 0.0
        %1017 = vmatpush1.msra.mxu0 0.0
        %1018 = vmatprep.subr.mxu0 0.0
        %1019 = vmatpush1.msra.mxu0 0.0
        %1020 = vmatprep.subr.mxu0 0.0
        %1021 = vmatpush1.msra.mxu0 0.0
        %1022 = vmatprep.subr.mxu0 0.0
        %1023 = vmatpush1.msra.mxu0 0.0
        %1024 = vmatprep.subr.mxu0 0.0
        %1025 = vmatpush1.msra.mxu0 0.0
        %1026 = vmatprep.subr.mxu0 0.0
        %1027 = vmatpush1.msra.mxu0 0.0
        %1028 = vmatprep.subr.mxu0 0.0
        %1029 = vmatpush1.msra.mxu0 0.0
        %1030 = vmatprep.mubr.f32.mxu0 0.0
        %1031 = vmatmul.mubr.f32.gmra.mrb[0].mxu0 %v964
        %v1032 = vpop.f32.mrb[0].mxu0
        %v1033 = vadd.f32 0.0, %v1032
        %v1034 = vpop.f32.mrb[0].mxu0
        %1035 = vdwg.mxu0
        %v1036 = vadd.f32 %v1033, 1e-06
        %v1037 = vrcp.pop %v1036
        %1039 = vset.pattern.permute.xlu0 8
        %1040 = vperm.xlu0 %1039, %v1037
        %v1041 = vpop.permute.xlu0 %1040
        %v1043 = vmul.f32 %v1033, %v1041
        %1045 = vrot.lane.b32.xlu0 %v655, 8
        %v1046 = vpop.permute.xlu0 %1045
        %1049 = vrot.lane.b32.xlu0 %v849, 16
        %v1050 = vpop.permute.xlu0 %1049
        %1053 = vrot.lane.b32.xlu0 %v1043, 24
        %v1054 = vpop.permute.xlu0 %1053
        %v1056 = vsel %vm272, %v459, %v1046
        %vm1057 = vcmask 130048
        %v1058 = vsel %vm1057, %v1056, %v1050
        %vm1059 = vcmask 195584
        %v1060 = vsel %vm1059, %v1058, %v1054
        %vm1061 = vcmask 261120
        %1062 = vst.msk [vmem:[%s256] sm:$0xff] %vm1061, %v1060
        %s1063 = sand.u32 %s109, 1
        %s1064 = scalar_lea.sflag [#allocation4], %s1063
        %s1065 = sand.u32 %s109, 1
        %s1066 = smul.addr %s1065, 8
        %s1067 = scalar_lea.vmem [#allocation8], %s1066
        // Predicated region
        $region45: #{tpu_custom_call.1} parent=31 // pred_check
          %p1068 = pneg %p119
        $region46: #{tpu_custom_call.1} parent=31 // pred_check_branch
          %1070 = sbr.rel (%p1068) target = $region48
        $region47: #{tpu_custom_call.1} parent=31 // pred_region
          %s1072 = ssub.s32 128, 128
          %1073 = vsyncadd %s1064, %s1072
          %s1074 = smul.addr %s23, 128
          %s1075 = scalar_lea.hbm %s3, %s1074
          %s1077 = sshll.u32 %s1067, 4
          %s1078 = int_to_ptr.vmem [resolvable:$true] %s1077
          %1080 = dma.vmem_to_hbm [thread:$0]  %s1078, 128, %s1075, %s1064
        $region48: #{tpu_custom_call.1} parent=31 // pred_fallthru
          _
      $region32: #{tpu_custom_call.1} parent=5 // pred_fallthru
        _
      %p1081 = scmp.le.s32.totalorder 2, %s18
      // Predicated region
      $region49: #{tpu_custom_call.1} parent=5 // pred_check
        %p1082 = pneg %p1081
      $region50: #{tpu_custom_call.1} parent=5 // pred_check_branch
        %1084 = sbr.rel (%p1082) target = $region52
      $region51: #{tpu_custom_call.1} parent=5 // pred_region
        %s1085 = ssub.s32 %s18, 2
        // Predicated region
        $region53: #{tpu_custom_call.1} parent=51 // pred_check
          %p1086 = pneg %p125
        $region54: #{tpu_custom_call.1} parent=51 // pred_check_branch
          %1088 = sbr.rel (%p1086) target = $region56
        $region55: #{tpu_custom_call.1} parent=51 // pred_region
          %s1089 = sand.u32 %s110, 1
          %s1090 = scalar_lea.sflag [#allocation4], %s1089
          %s1091 = sand.u32 %s110, 1
          %s1092 = smul.addr %s1091, 8
          %s1093 = scalar_lea.vmem [#allocation8], %s1092
          %1094 = dma.done %s1090, 128
        $region56: #{tpu_custom_call.1} parent=51 // pred_fallthru
          _
      $region52: #{tpu_custom_call.1} parent=5 // pred_fallthru
        _
    $region6: #{tpu_custom_call.1} parent=1 // loop_footer
      %s22 = sadd.s32 1, %s18
    $region7: #{tpu_custom_call.1} parent=1 // loop_footer_branch
      %17 = sbr.rel target = $region3
    $region8: #{tpu_custom_call.1} parent=1 // loop_exit
      _
    %1095 = vsyncpa [#allocation3], 1
    %s1096 = scalar_lea.sflag [#allocation3], 1
    %1097 = vsyncpa %s1096, 1
    %1098 = vsyncpa [#allocation6], 1
    %s1099 = scalar_lea.sflag [#allocation6], 1
    %1100 = vsyncpa %s1099, 1
    %1101 = vsyncpa [#allocation4], 1
    %s1102 = scalar_lea.sflag [#allocation4], 1
    %1103 = vsyncpa %s1102, 1

</llo_original>
